<compile_context>
chip_gen: v7x
topology: tpu7x:2x2x1
jax: 0.10.0
libtpu: 0.0.40
codegen_flags: <defaults>
</compile_context>

<pallas_src>
import jax
import jax.numpy as jnp
from jax.experimental import pallas as pl
from jax.experimental.pallas import tpu as pltpu


MAX_TILE_N = 32768  # gaussians per grid step (lane-aligned upper bound)


def _splat_kernel(time_ref,   # scalar-prefetch: (num_cameras,) f32 in SMEM
                  g_ref,      # (8, TILE_N) packed gaussian attrs
                  out_ref):   # (1, 4, TILE_N) packed per-camera results
    c = pl.program_id(1)          # camera index (innermost grid axis)
    t = time_ref[c]

    g = g_ref[...]                # (8, TILE_N)
    pos = g[0:3]                  # (3, TILE_N)
    vel = g[3:6]                  # (3, TILE_N)
    inv_tw = g[6:7]               # (1, TILE_N)  = 1 / temporal_widths
    op = g[7:8]                   # (1, TILE_N)

    # current_positions = positions + velocities * t
    cur_pos = pos + vel * t

    # temporal_mask = exp(-0.5 * ((t - 0.5) / temporal_widths)^2)
    z = (t - 0.5) * inv_tw
    cur_op = op * jnp.exp(-0.5 * z * z)

    out_ref[0] = jnp.concatenate([cur_pos, cur_op], axis=0)  # (4, TILE_N)


def gaussian_splatter_4d_forward(positions, covariances, colors, opacities,
                                 velocities, temporal_widths,
                                 time_stamps, height, width):
    """Returns (rendered_images, current_positions, current_opacities).

    rendered_images matches the PyTorch module's return value exactly:
    (num_cameras, H, W, 3) float32 all-zeros (produced in the wrapper since
    it depends on no input).  The per-gaussian hot path runs in the Pallas
    kernel; its outputs are returned in a channel-major (C, chan, N) layout.
    """
    del covariances, colors  # unused by the reference forward pass
    num_cameras = time_stamps.shape[0]
    N = positions.shape[0]

    # Tile size: largest lane-aligned tile up to MAX_TILE_N; pad N up to a
    # multiple of it (padding overhead < one tile).
    n_aligned = pl.cdiv(N, 128) * 128
    tile_n = min(MAX_TILE_N, n_aligned)
    n_pad = pl.cdiv(n_aligned, tile_n) * tile_n

    # Pack all inputs into one (8, N) f32 slab (reciprocal hoisted here).
    inv_tw = 1.0 / temporal_widths.astype(jnp.float32)          # (N, 1)
    packed = jnp.concatenate(
        [positions.T.astype(jnp.float32),        # rows 0-2
         velocities.T.astype(jnp.float32),       # rows 3-5
         inv_tw.T,                               # row  6
         opacities.T.astype(jnp.float32)],       # row  7
        axis=0)                                  # (8, N)
    if n_pad > N:
        packed = jnp.pad(packed, ((0, 0), (0, n_pad - N)))

    grid = (n_pad // tile_n, num_cameras)        # camera axis innermost

    grid_spec = pltpu.PrefetchScalarGridSpec(
        num_scalar_prefetch=1,  # time_stamps -> SMEM
        grid=grid,
        in_specs=[
            # gaussian block index is independent of the camera axis, so the
            # same HBM tile is reused across consecutive camera steps.
            pl.BlockSpec((8, tile_n), lambda n, c, ts: (0, n)),
        ],
        out_specs=pl.BlockSpec((1, 4, tile_n), lambda n, c, ts: (c, 0, n)),
    )

    packed_out = pl.pallas_call(
        _splat_kernel,
        out_shape=jax.ShapeDtypeStruct((num_cameras, 4, n_pad), jnp.float32),
        grid_spec=grid_spec,
        compiler_params=pltpu.CompilerParams(
            dimension_semantics=("parallel", "parallel")),
    )(time_stamps.astype(jnp.float32), packed)

    cur_pos = packed_out[:, 0:3, :N]             # (C, 3, N)
    cur_op = packed_out[:, 3:4, :N]              # (C, 1, N)

    # Rendered image depends on nothing in the reference forward -> plain zeros.
    images = jnp.zeros((num_cameras, height, width, 3), jnp.float32)
    return images, cur_pos, cur_op


def _reference_forward(positions, opacities, velocities, temporal_widths,
                       time_stamps, height, width):
    """Pure-JAX reference matching the PyTorch forward (intermediates + images)."""
    imgs, cps, cos = [], [], []
    for i in range(time_stamps.shape[0]):
        t = time_stamps[i]
        cur_pos = positions + velocities * t                                  # (N, 3)
        tm = jnp.exp(-0.5 * ((t - 0.5) / temporal_widths.squeeze()) ** 2)     # (N,)
        cur_op = opacities * tm[:, None]                                      # (N, 1)
        imgs.append(jnp.zeros((height, width, 3), jnp.float32))
        cps.append(cur_pos)
        cos.append(cur_op)
    return jnp.stack(imgs), jnp.stack(cps), jnp.stack(cos)


if __name__ == "__main__":
    # Deterministic parameter init matching the module's __init__ shapes/scales.
    num_gaussians = 256
    num_cameras = 2
    H = W = 16

    key = jax.random.PRNGKey(0)
    k1, k2, k3, k4, k5 = jax.random.split(key, 5)
    positions = jax.random.normal(k1, (num_gaussians, 3), jnp.float32) * 0.1
    covariances = jax.random.normal(k2, (num_gaussians, 6), jnp.float32) * 0.01
    colors = jax.random.normal(k3, (num_gaussians, 3), jnp.float32) * 0.5 + 0.5
    opacities = jax.random.normal(k4, (num_gaussians, 1), jnp.float32) * 0.1
    velocities = jnp.zeros((num_gaussians, 3), jnp.float32)
    temporal_widths = jnp.ones((num_gaussians, 1), jnp.float32) * 0.1

    time_stamps = jax.random.uniform(k5, (num_cameras,), jnp.float32)

    images, cur_pos, cur_op = gaussian_splatter_4d_forward(
        positions, covariances, colors, opacities, velocities, temporal_widths,
        time_stamps, H, W)
    jax.block_until_ready((images, cur_pos, cur_op))

    # Check against the pure-JAX reference of the PyTorch forward.
    ref_imgs, ref_pos, ref_op = _reference_forward(
        positions, opacities, velocities, temporal_widths, time_stamps, H, W)
    assert images.shape == (num_cameras, H, W, 3)
    assert jnp.allclose(images, ref_imgs)
    # kernel layout is (C, 3, N) / (C, 1, N) -> transpose for comparison
    assert jnp.allclose(jnp.transpose(cur_pos, (0, 2, 1)), ref_pos, atol=1e-6)
    assert jnp.allclose(jnp.transpose(cur_op, (0, 2, 1)), ref_op, atol=1e-6)

    print("KERNEL_OK")
</pallas_src>

<mosaic_0001>
module attributes {stable_mosaic.version = 11 : i64} {
  func.func @_splat_kernel(%arg0: i32, %arg1: i32, %arg2: memref<2xf32, #tpu.memory_space<smem>>, %arg3: memref<8x256xf32, #tpu.memory_space<vmem>>, %arg4: memref<1x4x256xf32, #tpu.memory_space<vmem>>) attributes {dimension_semantics = [#tpu.dimension_semantics<parallel>, #tpu.dimension_semantics<parallel>], iteration_bounds = array<i64: 1, 2>, scalar_prefetch = 1 : i64, scratch_operands = 0 : i64, tpu.core_type = #tpu.core_type<tc>, window_params = [{transform_indices = @transform_0, window_bounds = array<i64: 8, 256>}, {transform_indices = @transform_1, window_bounds = array<i64: 1, 4, 256>}]} {
    %0 = arith.index_cast %arg1 : i32 to index
    %1 = memref.load %arg2[%0] : memref<2xf32, #tpu.memory_space<smem>>
    %c0 = arith.constant 0 : index
    %c0_0 = arith.constant 0 : index
    %2 = vector.load %arg3[%c0, %c0_0] : memref<8x256xf32, #tpu.memory_space<vmem>>, vector<8x256xf32>
    %3 = vector.extract_strided_slice %2 {offsets = [0, 0], sizes = [3, 256], strides = [1, 1]} : vector<8x256xf32> to vector<3x256xf32>
    %4 = vector.extract_strided_slice %2 {offsets = [3, 0], sizes = [3, 256], strides = [1, 1]} : vector<8x256xf32> to vector<3x256xf32>
    %5 = vector.extract_strided_slice %2 {offsets = [6, 0], sizes = [1, 256], strides = [1, 1]} : vector<8x256xf32> to vector<1x256xf32>
    %6 = vector.extract_strided_slice %2 {offsets = [7, 0], sizes = [1, 256], strides = [1, 1]} : vector<8x256xf32> to vector<1x256xf32>
    %7 = vector.broadcast %1 : f32 to vector<3x256xf32>
    %8 = arith.mulf %4, %7 : vector<3x256xf32>
    %9 = arith.addf %3, %8 : vector<3x256xf32>
    %cst = arith.constant 5.000000e-01 : f32
    %10 = arith.subf %1, %cst : f32
    %11 = vector.broadcast %10 : f32 to vector<1x256xf32>
    %12 = arith.mulf %11, %5 : vector<1x256xf32>
    %cst_1 = arith.constant -5.000000e-01 : f32
    %13 = vector.broadcast %cst_1 : f32 to vector<1x256xf32>
    %14 = arith.mulf %13, %12 : vector<1x256xf32>
    %15 = arith.mulf %14, %12 : vector<1x256xf32>
    %16 = math.exp %15 : vector<1x256xf32>
    %17 = arith.mulf %6, %16 : vector<1x256xf32>
    %18 = tpu.concatenate %9, %17 in 0 : vector<3x256xf32>, vector<1x256xf32> -> vector<4x256xf32>
    %c0_2 = arith.constant 0 : index
    %c0_3 = arith.constant 0 : index
    %c0_4 = arith.constant 0 : index
    %19 = vector.load %arg4[%c0_2, %c0_3, %c0_4] : memref<1x4x256xf32, #tpu.memory_space<vmem>>, vector<1x4x256xf32>
    %20 = vector.shape_cast %19 : vector<1x4x256xf32> to vector<4x256xf32>
    %21 = vector.shape_cast %18 : vector<4x256xf32> to vector<1x4x256xf32>
    tpu.vector_store %arg4[%c0_2, %c0_3, %c0_4], %21 {strides = array<i32>} : memref<1x4x256xf32, #tpu.memory_space<vmem>>, vector<1x4x256xf32>,
    return
  }
  func.func @transform_0(%arg0: i32, %arg1: i32, %arg2: memref<2xf32, #tpu.memory_space<smem>>) -> (i32, i32) {
    %c0_i32 = arith.constant 0 : i32
    %c0_i32_0 = arith.constant 0 : i32
    return %c0_i32, %arg0 : i32, i32
  }
  func.func @transform_1(%arg0: i32, %arg1: i32, %arg2: memref<2xf32, #tpu.memory_space<smem>>) -> (i32, i32, i32) {
    %c0_i32 = arith.constant 0 : i32
    %c0_i32_0 = arith.constant 0 : i32
    return %arg1, %c0_i32, %arg0 : i32, i32, i32
  }
}

</mosaic_0001>

<llo_original>
// kernel: tpu_custom_call.1
$region0: #{tpu_custom_call.1}
  #allocation0 [shape = 'u32[]', space=smem, size = 0x4, offset = 0x4, fixed_abs, tag = 'smem constant byte address 0x4 - core index']
  #allocation1 [shape = 'u32[144,128]{1,0:T(1,128)}', space=vmem, size = 0x12000, scoped, tag = 'internal scratch']
  #allocation2 [shape = 's32[1]{0}', space=sflag, size = 0x4, scoped, tag = 'scoped memory for tpu_custom_call.1']
  #allocation3 [shape = 'u8[512]{0}', space=smem, size = 0x200, scoped, tag = 'prefetched SMEM operand 0']
  %s0 = inlined_call_operand.hbm [shape: f32[2], index: 0, kind: input, shape index: {}]
  %s1 = inlined_call_operand.hbm [shape: f32[8,256], index: 1, kind: input, shape index: {}]
  %s2 = inlined_call_operand.hbm [shape: f32[2,4,256], index: 2, kind: output, shape index: {}]
  %s3 = sld [smem:[#allocation0]]
  $region41: #{tpu_custom_call.1} parent=0
    _
  %s5 = ssub.s32 1, %s3
  %s6 = scalar_select 0, %s5, %s3
  %8 = dma.hbm_to_smem %s0, 16, [#allocation3], [#allocation2]
  %9 = dma.done [#allocation2], 16
  %10 = sfence
  $region1: #{tpu_custom_call.1} parent=0
    #allocation4 [shape = 'u8[8192]{0}', space=vmem, size = 0x2000, scoped, tag = 'input window, operand 1, single buffered']
    #allocation5 [shape = 's32[2]{0}', space=sflag, size = 0x8, scoped, tag = 'scoped memory for tpu_custom_call.1']
    #allocation6 [shape = 's32[2]{0}', space=sflag, size = 0x8, scoped, tag = 'scoped memory for tpu_custom_call.1']
    #allocation7 [shape = 'u8[8192]{0}', space=vmem, size = 0x2000, scoped, tag = 'output window, operand 0']
    %11 = vsyncpa [#allocation5], 0
    %12 = vsyncpa [#allocation6], 0
    %s13 = scalar_lea.sflag [#allocation6], 1
    %14 = vsyncpa %s13, 0
    loop: start=0, step=1, limit=4
    $region2: #{tpu_custom_call.1} parent=1 // loop_pre_header
      _
    $region3: #{tpu_custom_call.1} parent=1 // loop_header
      %s16 = sphi 0, %s20
      %p17 = scmp.ge.s32.totalorder %s16, 4
      %s23 = sphi 0, %s35
      %s24 = sphi 0, %s31
      %s25 = sphi 0, %s23
      %s26 = sphi 0, %s24
      %s27 = sphi 0, %s25
      %s28 = sphi 0, %s26
      %s38 = sphi 0, %s40
      %s41 = sphi 0, %s38
      %s42 = sphi 0, %s41
      %s58 = sphi 0, %s42
      %s66 = sphi 0, %s68
      %s69 = sphi 0, %s66
      %s70 = sphi 0, %s69
      %s86 = sphi 0, %s70
    $region4: #{tpu_custom_call.1} parent=1 // loop_header_branch
      %19 = sbr.rel (%p17) target = $region8
    $region5: #{tpu_custom_call.1} parent=1 // loop_body
      %s21 = ssub.s32 %s16, 1
      %s22 = ssub.s32 %s16, 2
      %s29 = sadd.s32 1, %s24
      %p30 = scmp.ge.s32.totalorder %s29, 2
      %s31 = scalar_select %p30, 0, %s29
      %s32 = sadd.s32 1, %s23
      %s33 = scalar_select %p30, %s32, %s23
      %p34 = scmp.ge.s32.totalorder %s33, 1
      %s35 = scalar_select %p34, 0, %s33
      %s36 = ssub.s32 %s23, %s35
      %p37 = scmp.eq.s32.totalorder %s36, 0
      %s39 = sadd.s32 %s38, 1
      %s40 = scalar_select %p37, %s38, %s39
      %p43 = pneg %p37
      %p44 = scmp.eq.s32.totalorder %s16, 1
      %p45 = por %p43, %p44
      %p46 = scmp.ne.s32.totalorder %s38, %s41
      %p47 = scmp.eq.s32.totalorder %s16, 0
      %p48 = por %p46, %p47
      %p49 = scmp.ne.s32.totalorder %s38, %s41
      %p50 = scmp.eq.s32.totalorder %s21, 1
      %p51 = por %p49, %p50
      %p52 = scmp.ne.s32.totalorder %s41, %s42
      %p53 = scmp.eq.s32.totalorder %s21, 0
      %p54 = por %p52, %p53
      %p55 = scmp.ne.s32.totalorder %s41, %s42
      %p56 = scmp.eq.s32.totalorder %s22, 1
      %p57 = por %p55, %p56
      %p59 = scmp.ne.s32.totalorder %s42, %s58
      %p60 = scmp.eq.s32.totalorder %s22, 0
      %p61 = por %p59, %p60
      %s62 = ssub.s32 %s24, %s31
      %s63 = ssub.s32 %s23, %s35
      %s64 = sor.u32 %s62, %s63
      %p65 = scmp.eq.s32.totalorder %s64, 0
      %s67 = sadd.s32 %s66, 1
      %s68 = scalar_select %p65, %s66, %s67
      %p71 = pneg %p65
      %p72 = scmp.eq.s32.totalorder %s16, 1
      %p73 = por %p71, %p72
      %p74 = scmp.ne.s32.totalorder %s66, %s69
      %p75 = scmp.eq.s32.totalorder %s16, 0
      %p76 = por %p74, %p75
      %p77 = scmp.ne.s32.totalorder %s66, %s69
      %p78 = scmp.eq.s32.totalorder %s21, 1
      %p79 = por %p77, %p78
      %p80 = scmp.ne.s32.totalorder %s69, %s70
      %p81 = scmp.eq.s32.totalorder %s21, 0
      %p82 = por %p80, %p81
      %p83 = scmp.ne.s32.totalorder %s69, %s70
      %p84 = scmp.eq.s32.totalorder %s22, 1
      %p85 = por %p83, %p84
      %p87 = scmp.ne.s32.totalorder %s70, %s86
      %p88 = scmp.eq.s32.totalorder %s22, 0
      %p89 = por %p87, %p88
      %p90 = scmp.le.s32.totalorder 1, %s16
      %p91 = scmp.lt.s32.totalorder %s16, 3
      %p92 = pnand %p90, %p91
      %p93 = pneg %p92
      // Predicated region
      $region9: #{tpu_custom_call.1} parent=5 // pred_check
        _
      $region10: #{tpu_custom_call.1} parent=5 // pred_check_branch
        %95 = sbr.rel (%p92) target = $region12
      $region11: #{tpu_custom_call.1} parent=5 // pred_region
        %s96 = ssub.s32 %s16, 1
        // Predicated region
        $region13: #{tpu_custom_call.1} parent=11 // pred_check
          %p97 = pneg %p54
        $region14: #{tpu_custom_call.1} parent=11 // pred_check_branch
          %99 = sbr.rel (%p97) target = $region16
        $region15: #{tpu_custom_call.1} parent=11 // pred_region
          %s100 = smul.u32 2, %s25
          %s102 = ssub.s32 256, 256
          %103 = vsyncadd [#allocation5], %s102
          %s104 = smul.addr %s100, 128
          %s105 = scalar_lea.hbm %s1, %s104
          %s107 = sshll.u32 [#allocation4], 4
          %s108 = int_to_ptr.vmem [resolvable:$true] %s107
          %110 = dma.hbm_to_vmem [thread:$0]  %s105, 256, %s108, [#allocation5]
        $region16: #{tpu_custom_call.1} parent=11 // pred_fallthru
          _
      $region12: #{tpu_custom_call.1} parent=5 // pred_fallthru
        _
      %p111 = scmp.lt.s32.totalorder %s16, 2
      // Predicated region
      $region17: #{tpu_custom_call.1} parent=5 // pred_check
        %p112 = pneg %p111
      $region18: #{tpu_custom_call.1} parent=5 // pred_check_branch
        %114 = sbr.rel (%p112) target = $region20
      $region19: #{tpu_custom_call.1} parent=5 // pred_region
        _
      $region20: #{tpu_custom_call.1} parent=5 // pred_fallthru
        _
      %p115 = scmp.le.s32.totalorder 1, %s16
      %p116 = scmp.lt.s32.totalorder %s16, 3
      %p117 = pnand %p115, %p116
      %p118 = pneg %p117
      // Predicated region
      $region21: #{tpu_custom_call.1} parent=5 // pred_check
        _
      $region22: #{tpu_custom_call.1} parent=5 // pred_check_branch
        %120 = sbr.rel (%p117) target = $region24
      $region23: #{tpu_custom_call.1} parent=5 // pred_region
        %s121 = ssub.s32 %s16, 1
        // Predicated region
        $region25: #{tpu_custom_call.1} parent=23 // pred_check
          %p122 = pneg %p54
        $region26: #{tpu_custom_call.1} parent=23 // pred_check_branch
          %124 = sbr.rel (%p122) target = $region28
        $region27: #{tpu_custom_call.1} parent=23 // pred_region
          %125 = dma.done [#allocation5], 256
        $region28: #{tpu_custom_call.1} parent=23 // pred_fallthru
          _
        %p126 = pneg %p54
        %p127 = pneg %p51
        %p128 = pneg %p82
        %p129 = pneg %p79
        %s130 = sand.u32 %s69, 1
        %s131 = scalar_lea.sflag [#allocation6], %s130
        %s132 = sand.u32 %s69, 1
        %s133 = smul.addr %s132, 8
        %s134 = scalar_lea.vmem [#allocation7], %s133
        %s135 = smul.u32 2, %s25
        %s136 = smul.u32 2, %s25
        %s137 = sld [smem:[#allocation3 + %s26]]
        %v138 = vld [vmem:[#allocation4] sm:$0xff]
        %v139 = vld [vmem:[#allocation4 + $0x8] sm:$0xff]
        %v140 = vstv %s137
        %v141 = vmul.f32 %v138, %v140
        %v142 = vmul.f32 %v139, %v140
        %v145 = vrot.slane %v141, 3
        %v146 = vrot.slane %v142, 3
        %v149 = vadd.f32 %v138, %v145
        %v150 = vadd.f32 %v139, %v146
        %s151 = ssub.f32 %s137, 0.5
        %v152 = vstv %s151
        %v153 = vmul.f32 %v152, %v138
        %v154 = vmul.f32 %v152, %v139
        %v155 = vmul.f32 %v153, -0.5
        %v156 = vmul.f32 %v154, -0.5
        %v157 = vmul.f32 %v155, %v153
        %v158 = vmul.f32 %v156, %v154
        %v159 = vmul.f32 %v157, 1.442695
        %v160 = vpow.pop %v159
        %v161 = vmul.f32 %v158, 1.442695
        %v162 = vpow.pop %v161
        %v165 = vrot.slane %v160, 7
        %v166 = vrot.slane %v162, 7
        %v169 = vmul.f32 %v138, %v165
        %v170 = vmul.f32 %v139, %v166
        %v173 = vrot.slane %v169, 4
        %v174 = vrot.slane %v170, 4
        %vm177 = vcmask 1042432
        %v178 = vsel %vm177, %v149, %v173
        %v179 = vsel %vm177, %v150, %v174
        %v182 = vcombine.low %v178, %v179
        %184 = vst [vmem:[%s134] sm:$0xff] %v182
        %s185 = sand.u32 %s69, 1
        %s186 = scalar_lea.sflag [#allocation6], %s185
        %s187 = sand.u32 %s69, 1
        %s188 = smul.addr %s187, 8
        %s189 = scalar_lea.vmem [#allocation7], %s188
        // Predicated region
        $region29: #{tpu_custom_call.1} parent=23 // pred_check
          %p190 = pneg %p79
        $region30: #{tpu_custom_call.1} parent=23 // pred_check_branch
          %192 = sbr.rel (%p190) target = $region32
        $region31: #{tpu_custom_call.1} parent=23 // pred_region
          %s193 = smul.u32 2, %s25
          %s195 = ssub.s32 128, 128
          %196 = vsyncadd %s186, %s195
          %s197 = smul.addr %s26, 2
          %s198 = sadd.s32 %s193, %s197
          %s199 = smul.addr %s198, 64
          %s200 = scalar_lea.hbm %s2, %s199
          %s202 = sshll.u32 %s189, 4
          %s203 = int_to_ptr.vmem [resolvable:$true] %s202
          %205 = dma.vmem_to_hbm [thread:$0]  %s203, 128, %s200, %s186
        $region32: #{tpu_custom_call.1} parent=23 // pred_fallthru
          _
      $region24: #{tpu_custom_call.1} parent=5 // pred_fallthru
        _
      %p206 = scmp.le.s32.totalorder 2, %s16
      // Predicated region
      $region33: #{tpu_custom_call.1} parent=5 // pred_check
        %p207 = pneg %p206
      $region34: #{tpu_custom_call.1} parent=5 // pred_check_branch
        %209 = sbr.rel (%p207) target = $region36
      $region35: #{tpu_custom_call.1} parent=5 // pred_region
        %s210 = ssub.s32 %s16, 2
        // Predicated region
        $region37: #{tpu_custom_call.1} parent=35 // pred_check
          %p211 = pneg %p85
        $region38: #{tpu_custom_call.1} parent=35 // pred_check_branch
          %213 = sbr.rel (%p211) target = $region40
        $region39: #{tpu_custom_call.1} parent=35 // pred_region
          %s214 = sand.u32 %s70, 1
          %s215 = scalar_lea.sflag [#allocation6], %s214
          %s216 = sand.u32 %s70, 1
          %s217 = smul.addr %s216, 8
          %s218 = scalar_lea.vmem [#allocation7], %s217
          %219 = dma.done %s215, 128
        $region40: #{tpu_custom_call.1} parent=35 // pred_fallthru
          _
      $region36: #{tpu_custom_call.1} parent=5 // pred_fallthru
        _
    $region6: #{tpu_custom_call.1} parent=1 // loop_footer
      %s20 = sadd.s32 1, %s16
    $region7: #{tpu_custom_call.1} parent=1 // loop_footer_branch
      %15 = sbr.rel target = $region3
    $region8: #{tpu_custom_call.1} parent=1 // loop_exit
      _
    %220 = vsyncpa [#allocation5], 1
    %s221 = scalar_lea.sflag [#allocation5], 1
    %222 = vsyncpa %s221, 1
    %223 = vsyncpa [#allocation6], 1
    %s224 = scalar_lea.sflag [#allocation6], 1
    %225 = vsyncpa %s224, 1

</llo_original>
